<compile_context>
chip_gen: v6e
topology: v6e:2x2x1
jax: 0.10.0
libtpu: 0.0.40
codegen_flags: <defaults>
</compile_context>

<pallas_src>
import math
from functools import partial

import jax
import jax.numpy as jnp
from jax.experimental import pallas as pl
from jax.experimental.pallas import tpu as pltpu


def critic_kernel(x_ref,
                  w1_ref, b1_ref,
                  w2_ref, b2_ref,
                  w3_ref, b3_ref,
                  w4_ref, b4_ref,
                  w5_ref, b5_ref,
                  w6_ref, b6_ref,
                  o_ref,
                  *, compute_dtype=jnp.float32):
    h = x_ref[...]

    def linear_relu(h, w_ref, b_ref):
        y = jnp.dot(h.astype(compute_dtype), w_ref[...].astype(compute_dtype),
                    preferred_element_type=jnp.float32) + b_ref[...]
        return jnp.maximum(y, 0.0)

    h = linear_relu(h, w1_ref, b1_ref)   # (TB, 64)
    h = linear_relu(h, w2_ref, b2_ref)   # (TB, 32)
    h = linear_relu(h, w3_ref, b3_ref)   # (TB, 32)
    h = linear_relu(h, w4_ref, b4_ref)   # (TB, 16)
    h = linear_relu(h, w5_ref, b5_ref)   # (TB, 16)

    # Final 1-unit value head (no ReLU): VPU multiply + lane (XLU) reduction
    # instead of a 1-column MXU matmul -- shortens the serial 6-matmul chain.
    # w6_ref is the PyTorch-layout (1, 16) row; b6_ref is (1, 1).
    o_ref[...] = jnp.sum(h * w6_ref[...], axis=-1, keepdims=True) + b6_ref[...]
    # Output last-dim is 1 -> masked store; absolute bytes are tiny, so we skip
    # the lane-dense (1, TILE_B) transpose trick unless profiling shows it matters.


def _round_up(n, m):
    return ((n + m - 1) // m) * m


def init_linear_params(key, in_features, out_features):
    """PyTorch-style init: U(-1/sqrt(fan_in), 1/sqrt(fan_in)).
    Returns W with shape (in_features, out_features) (already transposed) and
    b with shape (1, out_features)."""
    kw, kb = jax.random.split(key)
    bound = 1.0 / math.sqrt(in_features)
    w = jax.random.uniform(kw, (in_features, out_features),
                           dtype=jnp.float32, minval=-bound, maxval=bound)
    b = jax.random.uniform(kb, (1, out_features),
                           dtype=jnp.float32, minval=-bound, maxval=bound)
    return w, b


CRITIC_DIMS = [None, 64, 32, 32, 16, 16, 1]  # [n_inputs, ...hidden..., 1]


def make_critic_params(number_of_inputs, seed=0):
    dims = list(CRITIC_DIMS)
    dims[0] = number_of_inputs
    keys = jax.random.split(jax.random.PRNGKey(seed), len(dims) - 1)
    params = []
    for li, (k, d_in, d_out) in enumerate(zip(keys, dims[:-1], dims[1:])):
        w, b = init_linear_params(k, d_in, d_out)
        if li == len(dims) - 2:
            w = w.T  # last layer kept as a (1, 16) row for the VPU-reduce head
        params.extend([w, b])
    return params  # [w1, b1, ..., w5, b5, w6_row(1,16), b6(1,1)]


def critic_forward(x, params, *, tile_b=256, compute_dtype=jnp.float32):
    batch, n_in = x.shape

    # Batch tile: multiple of 8 (f32 sublanes), capped at tile_b.  tile_b<=1024
    # keeps activation buffers far below the 32 MiB scoped-VMEM default (v7x safe).
    tb = min(tile_b, _round_up(batch, 8))
    padded = _round_up(batch, tb)
    if padded != batch:
        x = jnp.pad(x, ((0, padded - batch), (0, 0)))
    n_tiles = padded // tb

    vmem = pltpu.MemorySpace.VMEM
    x_spec = pl.BlockSpec((tb, n_in), lambda i: (i, 0), memory_space=vmem)
    # Constant index maps -> each weight/bias is the same block every grid step
    # and stays VMEM-resident (fetched once, reused across all batch tiles).
    param_specs = [pl.BlockSpec(p.shape, lambda i: (0, 0), memory_space=vmem)
                   for p in params]
    out_spec = pl.BlockSpec((tb, 1), lambda i: (i, 0), memory_space=vmem)

    dims = list(CRITIC_DIMS)
    dims[0] = n_in
    flops = 2 * padded * sum(a * b for a, b in zip(dims[:-1], dims[1:]))
    weight_bytes = sum(int(p.size) * p.dtype.itemsize for p in params)
    bytes_accessed = padded * n_in * 4 + weight_bytes + padded * 4
    cost = pl.CostEstimate(flops=flops, transcendentals=0,
                           bytes_accessed=bytes_accessed)

    out = pl.pallas_call(
        partial(critic_kernel, compute_dtype=compute_dtype),
        out_shape=jax.ShapeDtypeStruct((padded, 1), jnp.float32),
        grid=(n_tiles,),
        in_specs=[x_spec] + param_specs,
        out_specs=out_spec,
        compiler_params=pltpu.CompilerParams(
            dimension_semantics=("parallel",)),
        cost_estimate=cost,
    )(x, *params)

    return out[:batch]


def critic_forward_ref(x, params):
    h = x
    for i in range(0, 10, 2):
        h = jnp.maximum(h @ params[i] + params[i + 1], 0.0)
    return h @ params[10].T + params[11]   # (B,16) @ (16,1) + (1,1)


if __name__ == "__main__":
    number_of_inputs = 32
    params = make_critic_params(number_of_inputs, seed=0)

    # Small per-step batch (single tile, grid=(1,)).
    x_small = jax.random.normal(jax.random.PRNGKey(0),
                                (8, number_of_inputs), dtype=jnp.float32)
    v_small = jax.block_until_ready(critic_forward(x_small, params))
    ref_small = critic_forward_ref(x_small, params)
    assert v_small.shape == (8, 1)
    assert jnp.allclose(v_small, ref_small, atol=1e-5, rtol=1e-5), \
        "small-batch mismatch vs JAX reference"

    # Larger rollout batch: exercises padding + multi-tile parallel grid with
    # VMEM-resident weights.
    x_big = jax.random.normal(jax.random.PRNGKey(1),
                              (300, number_of_inputs), dtype=jnp.float32)
    v_big = jax.block_until_ready(critic_forward(x_big, params, tile_b=256))
    ref_big = critic_forward_ref(x_big, params)
    assert v_big.shape == (300, 1)
    assert jnp.allclose(v_big, ref_big, atol=1e-5, rtol=1e-5), \
        "large-batch mismatch vs JAX reference"

    print("KERNEL_OK")
</pallas_src>

<mosaic_0001>
module attributes {stable_mosaic.version = 11 : i64} {
  func.func @critic_kernel(%arg0: i32, %arg1: memref<8x32xf32, #tpu.memory_space<vmem>>, %arg2: memref<32x64xf32, #tpu.memory_space<vmem>>, %arg3: memref<1x64xf32, #tpu.memory_space<vmem>>, %arg4: memref<64x32xf32, #tpu.memory_space<vmem>>, %arg5: memref<1x32xf32, #tpu.memory_space<vmem>>, %arg6: memref<32x32xf32, #tpu.memory_space<vmem>>, %arg7: memref<1x32xf32, #tpu.memory_space<vmem>>, %arg8: memref<32x16xf32, #tpu.memory_space<vmem>>, %arg9: memref<1x16xf32, #tpu.memory_space<vmem>>, %arg10: memref<16x16xf32, #tpu.memory_space<vmem>>, %arg11: memref<1x16xf32, #tpu.memory_space<vmem>>, %arg12: memref<1x16xf32, #tpu.memory_space<vmem>>, %arg13: memref<1x1xf32, #tpu.memory_space<vmem>>, %arg14: memref<8x1xf32, #tpu.memory_space<vmem>>) attributes {dimension_semantics = [#tpu.dimension_semantics<parallel>], iteration_bounds = array<i64: 1>, scalar_prefetch = 0 : i64, scratch_operands = 0 : i64, tpu.core_type = #tpu.core_type<tc>, window_params = [{transform_indices = @transform_0, window_bounds = array<i64: 8, 32>}, {pipeline_mode = #tpu.pipeline_mode<synchronous>, transform_indices = @transform_1, window_bounds = array<i64: 32, 64>}, {pipeline_mode = #tpu.pipeline_mode<synchronous>, transform_indices = @transform_2, window_bounds = array<i64: 1, 64>}, {pipeline_mode = #tpu.pipeline_mode<synchronous>, transform_indices = @transform_3, window_bounds = array<i64: 64, 32>}, {pipeline_mode = #tpu.pipeline_mode<synchronous>, transform_indices = @transform_4, window_bounds = array<i64: 1, 32>}, {pipeline_mode = #tpu.pipeline_mode<synchronous>, transform_indices = @transform_5, window_bounds = array<i64: 32, 32>}, {pipeline_mode = #tpu.pipeline_mode<synchronous>, transform_indices = @transform_6, window_bounds = array<i64: 1, 32>}, {pipeline_mode = #tpu.pipeline_mode<synchronous>, transform_indices = @transform_7, window_bounds = array<i64: 32, 16>}, {pipeline_mode = #tpu.pipeline_mode<synchronous>, transform_indices = @transform_8, window_bounds = array<i64: 1, 16>}, {pipeline_mode = #tpu.pipeline_mode<synchronous>, transform_indices = @transform_9, window_bounds = array<i64: 16, 16>}, {pipeline_mode = #tpu.pipeline_mode<synchronous>, transform_indices = @transform_10, window_bounds = array<i64: 1, 16>}, {pipeline_mode = #tpu.pipeline_mode<synchronous>, transform_indices = @transform_11, window_bounds = array<i64: 1, 16>}, {pipeline_mode = #tpu.pipeline_mode<synchronous>, transform_indices = @transform_12, window_bounds = array<i64: 1, 1>}, {transform_indices = @transform_13, window_bounds = array<i64: 8, 1>}]} {
    %c0 = arith.constant 0 : index
    %c0_0 = arith.constant 0 : index
    %0 = vector.load %arg1[%c0, %c0_0] : memref<8x32xf32, #tpu.memory_space<vmem>>, vector<8x32xf32>
    %c0_1 = arith.constant 0 : index
    %c0_2 = arith.constant 0 : index
    %1 = vector.load %arg2[%c0_1, %c0_2] : memref<32x64xf32, #tpu.memory_space<vmem>>, vector<32x64xf32>
    %cst = arith.constant dense<0.000000e+00> : vector<8x64xf32>
    %2 = tpu.matmul %0, %1, %cst {dimension_numbers = #tpu.dot_dimension_numbers<[1], [0], [0], [1], [0, 0, 1, 1], [], []>} : vector<8x32xf32>, vector<32x64xf32>, vector<8x64xf32> -> vector<8x64xf32>
    %c0_3 = arith.constant 0 : index
    %c0_4 = arith.constant 0 : index
    %3 = vector.load %arg3[%c0_3, %c0_4] : memref<1x64xf32, #tpu.memory_space<vmem>>, vector<1x64xf32>
    %4 = vector.broadcast %3 : vector<1x64xf32> to vector<8x64xf32>
    %5 = arith.addf %2, %4 : vector<8x64xf32>
    %cst_5 = arith.constant 0.000000e+00 : f32
    %6 = vector.broadcast %cst_5 : f32 to vector<8x64xf32>
    %7 = arith.maximumf %5, %6 : vector<8x64xf32>
    %c0_6 = arith.constant 0 : index
    %c0_7 = arith.constant 0 : index
    %8 = vector.load %arg4[%c0_6, %c0_7] : memref<64x32xf32, #tpu.memory_space<vmem>>, vector<64x32xf32>
    %cst_8 = arith.constant dense<0.000000e+00> : vector<8x32xf32>
    %9 = tpu.matmul %7, %8, %cst_8 {dimension_numbers = #tpu.dot_dimension_numbers<[1], [0], [0], [1], [0, 0, 1, 1], [], []>} : vector<8x64xf32>, vector<64x32xf32>, vector<8x32xf32> -> vector<8x32xf32>
    %c0_9 = arith.constant 0 : index
    %c0_10 = arith.constant 0 : index
    %10 = vector.load %arg5[%c0_9, %c0_10] : memref<1x32xf32, #tpu.memory_space<vmem>>, vector<1x32xf32>
    %11 = vector.broadcast %10 : vector<1x32xf32> to vector<8x32xf32>
    %12 = arith.addf %9, %11 : vector<8x32xf32>
    %cst_11 = arith.constant 0.000000e+00 : f32
    %13 = vector.broadcast %cst_11 : f32 to vector<8x32xf32>
    %14 = arith.maximumf %12, %13 : vector<8x32xf32>
    %c0_12 = arith.constant 0 : index
    %c0_13 = arith.constant 0 : index
    %15 = vector.load %arg6[%c0_12, %c0_13] : memref<32x32xf32, #tpu.memory_space<vmem>>, vector<32x32xf32>
    %cst_14 = arith.constant dense<0.000000e+00> : vector<8x32xf32>
    %16 = tpu.matmul %14, %15, %cst_14 {dimension_numbers = #tpu.dot_dimension_numbers<[1], [0], [0], [1], [0, 0, 1, 1], [], []>} : vector<8x32xf32>, vector<32x32xf32>, vector<8x32xf32> -> vector<8x32xf32>
    %c0_15 = arith.constant 0 : index
    %c0_16 = arith.constant 0 : index
    %17 = vector.load %arg7[%c0_15, %c0_16] : memref<1x32xf32, #tpu.memory_space<vmem>>, vector<1x32xf32>
    %18 = vector.broadcast %17 : vector<1x32xf32> to vector<8x32xf32>
    %19 = arith.addf %16, %18 : vector<8x32xf32>
    %cst_17 = arith.constant 0.000000e+00 : f32
    %20 = vector.broadcast %cst_17 : f32 to vector<8x32xf32>
    %21 = arith.maximumf %19, %20 : vector<8x32xf32>
    %c0_18 = arith.constant 0 : index
    %c0_19 = arith.constant 0 : index
    %22 = vector.load %arg8[%c0_18, %c0_19] : memref<32x16xf32, #tpu.memory_space<vmem>>, vector<32x16xf32>
    %cst_20 = arith.constant dense<0.000000e+00> : vector<8x16xf32>
    %23 = tpu.matmul %21, %22, %cst_20 {dimension_numbers = #tpu.dot_dimension_numbers<[1], [0], [0], [1], [0, 0, 1, 1], [], []>} : vector<8x32xf32>, vector<32x16xf32>, vector<8x16xf32> -> vector<8x16xf32>
    %c0_21 = arith.constant 0 : index
    %c0_22 = arith.constant 0 : index
    %24 = vector.load %arg9[%c0_21, %c0_22] : memref<1x16xf32, #tpu.memory_space<vmem>>, vector<1x16xf32>
    %25 = vector.broadcast %24 : vector<1x16xf32> to vector<8x16xf32>
    %26 = arith.addf %23, %25 : vector<8x16xf32>
    %cst_23 = arith.constant 0.000000e+00 : f32
    %27 = vector.broadcast %cst_23 : f32 to vector<8x16xf32>
    %28 = arith.maximumf %26, %27 : vector<8x16xf32>
    %c0_24 = arith.constant 0 : index
    %c0_25 = arith.constant 0 : index
    %29 = vector.load %arg10[%c0_24, %c0_25] : memref<16x16xf32, #tpu.memory_space<vmem>>, vector<16x16xf32>
    %cst_26 = arith.constant dense<0.000000e+00> : vector<8x16xf32>
    %30 = tpu.matmul %28, %29, %cst_26 {dimension_numbers = #tpu.dot_dimension_numbers<[1], [0], [0], [1], [0, 0, 1, 1], [], []>} : vector<8x16xf32>, vector<16x16xf32>, vector<8x16xf32> -> vector<8x16xf32>
    %c0_27 = arith.constant 0 : index
    %c0_28 = arith.constant 0 : index
    %31 = vector.load %arg11[%c0_27, %c0_28] : memref<1x16xf32, #tpu.memory_space<vmem>>, vector<1x16xf32>
    %32 = vector.broadcast %31 : vector<1x16xf32> to vector<8x16xf32>
    %33 = arith.addf %30, %32 : vector<8x16xf32>
    %cst_29 = arith.constant 0.000000e+00 : f32
    %34 = vector.broadcast %cst_29 : f32 to vector<8x16xf32>
    %35 = arith.maximumf %33, %34 : vector<8x16xf32>
    %c0_30 = arith.constant 0 : index
    %c0_31 = arith.constant 0 : index
    %36 = vector.load %arg12[%c0_30, %c0_31] : memref<1x16xf32, #tpu.memory_space<vmem>>, vector<1x16xf32>
    %37 = vector.broadcast %36 : vector<1x16xf32> to vector<8x16xf32>
    %38 = arith.mulf %35, %37 : vector<8x16xf32>
    %cst_32 = arith.constant dense<0.000000e+00> : vector<8xf32>
    %39 = vector.multi_reduction <add>, %38, %cst_32 [1] : vector<8x16xf32> to vector<8xf32>
    %40 = vector.shape_cast %39 : vector<8xf32> to vector<8x1xf32>
    %c0_33 = arith.constant 0 : index
    %c0_34 = arith.constant 0 : index
    %41 = vector.load %arg13[%c0_33, %c0_34] : memref<1x1xf32, #tpu.memory_space<vmem>>, vector<1x1xf32>
    %42 = vector.broadcast %41 : vector<1x1xf32> to vector<8x1xf32>
    %43 = arith.addf %40, %42 : vector<8x1xf32>
    %c0_35 = arith.constant 0 : index
    %c0_36 = arith.constant 0 : index
    %44 = vector.load %arg14[%c0_35, %c0_36] : memref<8x1xf32, #tpu.memory_space<vmem>>, vector<8x1xf32>
    tpu.vector_store %arg14[%c0_35, %c0_36], %43 {strides = array<i32>} : memref<8x1xf32, #tpu.memory_space<vmem>>, vector<8x1xf32>,
    return
  }
  func.func @transform_0(%arg0: i32) -> (i32, i32) {
    %c0_i32 = arith.constant 0 : i32
    %c0_i32_0 = arith.constant 0 : i32
    return %arg0, %c0_i32 : i32, i32
  }
  func.func @transform_1(%arg0: i32) -> (i32, i32) {
    %c0_i32 = arith.constant 0 : i32
    %c0_i32_0 = arith.constant 0 : i32
    %c0_i32_1 = arith.constant 0 : i32
    return %c0_i32, %c0_i32_0 : i32, i32
  }
  func.func @transform_2(%arg0: i32) -> (i32, i32) {
    %c0_i32 = arith.constant 0 : i32
    %c0_i32_0 = arith.constant 0 : i32
    %c0_i32_1 = arith.constant 0 : i32
    return %c0_i32, %c0_i32_0 : i32, i32
  }
  func.func @transform_3(%arg0: i32) -> (i32, i32) {
    %c0_i32 = arith.constant 0 : i32
    %c0_i32_0 = arith.constant 0 : i32
    %c0_i32_1 = arith.constant 0 : i32
    return %c0_i32, %c0_i32_0 : i32, i32
  }
  func.func @transform_4(%arg0: i32) -> (i32, i32) {
    %c0_i32 = arith.constant 0 : i32
    %c0_i32_0 = arith.constant 0 : i32
    %c0_i32_1 = arith.constant 0 : i32
    return %c0_i32, %c0_i32_0 : i32, i32
  }
  func.func @transform_5(%arg0: i32) -> (i32, i32) {
    %c0_i32 = arith.constant 0 : i32
    %c0_i32_0 = arith.constant 0 : i32
    %c0_i32_1 = arith.constant 0 : i32
    return %c0_i32, %c0_i32_0 : i32, i32
  }
  func.func @transform_6(%arg0: i32) -> (i32, i32) {
    %c0_i32 = arith.constant 0 : i32
    %c0_i32_0 = arith.constant 0 : i32
    %c0_i32_1 = arith.constant 0 : i32
    return %c0_i32, %c0_i32_0 : i32, i32
  }
  func.func @transform_7(%arg0: i32) -> (i32, i32) {
    %c0_i32 = arith.constant 0 : i32
    %c0_i32_0 = arith.constant 0 : i32
    %c0_i32_1 = arith.constant 0 : i32
    return %c0_i32, %c0_i32_0 : i32, i32
  }
  func.func @transform_8(%arg0: i32) -> (i32, i32) {
    %c0_i32 = arith.constant 0 : i32
    %c0_i32_0 = arith.constant 0 : i32
    %c0_i32_1 = arith.constant 0 : i32
    return %c0_i32, %c0_i32_0 : i32, i32
  }
  func.func @transform_9(%arg0: i32) -> (i32, i32) {
    %c0_i32 = arith.constant 0 : i32
    %c0_i32_0 = arith.constant 0 : i32
    %c0_i32_1 = arith.constant 0 : i32
    return %c0_i32, %c0_i32_0 : i32, i32
  }
  func.func @transform_10(%arg0: i32) -> (i32, i32) {
    %c0_i32 = arith.constant 0 : i32
    %c0_i32_0 = arith.constant 0 : i32
    %c0_i32_1 = arith.constant 0 : i32
    return %c0_i32, %c0_i32_0 : i32, i32
  }
  func.func @transform_11(%arg0: i32) -> (i32, i32) {
    %c0_i32 = arith.constant 0 : i32
    %c0_i32_0 = arith.constant 0 : i32
    %c0_i32_1 = arith.constant 0 : i32
    return %c0_i32, %c0_i32_0 : i32, i32
  }
  func.func @transform_12(%arg0: i32) -> (i32, i32) {
    %c0_i32 = arith.constant 0 : i32
    %c0_i32_0 = arith.constant 0 : i32
    %c0_i32_1 = arith.constant 0 : i32
    return %c0_i32, %c0_i32_0 : i32, i32
  }
  func.func @transform_13(%arg0: i32) -> (i32, i32) {
    %c0_i32 = arith.constant 0 : i32
    %c0_i32_0 = arith.constant 0 : i32
    return %arg0, %c0_i32 : i32, i32
  }
}

</mosaic_0001>

<llo_original>
// kernel: tpu_custom_call.1
$region0: #{tpu_custom_call.1}
  #allocation0 [shape = 'u32[]', space=smem, size = 0x4, offset = 0x4, fixed_abs, tag = 'smem constant byte address 0x4 - core index']
  #allocation1 [shape = 'u32[144,128]{1,0:T(1,128)}', space=vmem, size = 0x12000, scoped, tag = 'internal scratch']
  #allocation2 [shape = 'f32[1,1]{1,0:T(1,128)S(1)}', space=vmem, size = 0x200, scoped, tag = 'scoped memory for tpu_custom_call.1']
  %s0 = inlined_call_operand.vmem [shape: f32[8,32], index: 0, kind: input, shape index: {}]
  %s1 = inlined_call_operand.vmem [shape: f32[32,64], index: 1, kind: input, shape index: {}]
  %s2 = inlined_call_operand.vmem [shape: f32[1,64], index: 2, kind: input, shape index: {}]
  %s3 = inlined_call_operand.vmem [shape: f32[64,32], index: 3, kind: input, shape index: {}]
  %s4 = inlined_call_operand.vmem [shape: f32[1,32], index: 4, kind: input, shape index: {}]
  %s5 = inlined_call_operand.vmem [shape: f32[32,32], index: 5, kind: input, shape index: {}]
  %s6 = inlined_call_operand.vmem [shape: f32[1,32], index: 6, kind: input, shape index: {}]
  %s7 = inlined_call_operand.vmem [shape: f32[32,16], index: 7, kind: input, shape index: {}]
  %s8 = inlined_call_operand.vmem [shape: f32[1,16], index: 8, kind: input, shape index: {}]
  %s9 = inlined_call_operand.vmem [shape: f32[16,16], index: 9, kind: input, shape index: {}]
  %s10 = inlined_call_operand.vmem [shape: f32[1,16], index: 10, kind: input, shape index: {}]
  %s11 = inlined_call_operand.vmem [shape: f32[1,16], index: 11, kind: input, shape index: {}]
  %s12 = inlined_call_operand.<no memory space> [shape: f32[1,1], index: 12, kind: input, shape index: {}]
  %s13 = inlined_call_operand.vmem [shape: f32[8,1], index: 13, kind: output, shape index: {}]
  %s14 = sld [smem:[#allocation0]]
  $region62: #{tpu_custom_call.1} parent=0
    _
  %s16 = ssub.s32 1, %s14
  %s17 = scalar_select 0, %s16, %s14
  %v18 = vstv %s12
  %19 = vst [vmem:[#allocation2] sm:$0x1] %v18
  // Predicated region
  $region2: #{tpu_custom_call.1} parent=0 // pred_check
    _
  $region3: #{tpu_custom_call.1} parent=0 // pred_check_branch
    %21 = sbr.rel (0) target = $region5
  $region4: #{tpu_custom_call.1} parent=0 // pred_region
    _
  $region5: #{tpu_custom_call.1} parent=0 // pred_fallthru
    _
  // Predicated region
  $region6: #{tpu_custom_call.1} parent=0 // pred_check
    _
  $region7: #{tpu_custom_call.1} parent=0 // pred_check_branch
    %23 = sbr.rel (0) target = $region9
  $region8: #{tpu_custom_call.1} parent=0 // pred_region
    _
  $region9: #{tpu_custom_call.1} parent=0 // pred_fallthru
    _
  // Predicated region
  $region10: #{tpu_custom_call.1} parent=0 // pred_check
    _
  $region11: #{tpu_custom_call.1} parent=0 // pred_check_branch
    %25 = sbr.rel (0) target = $region13
  $region12: #{tpu_custom_call.1} parent=0 // pred_region
    _
  $region13: #{tpu_custom_call.1} parent=0 // pred_fallthru
    _
  // Predicated region
  $region14: #{tpu_custom_call.1} parent=0 // pred_check
    _
  $region15: #{tpu_custom_call.1} parent=0 // pred_check_branch
    %27 = sbr.rel (0) target = $region17
  $region16: #{tpu_custom_call.1} parent=0 // pred_region
    _
  $region17: #{tpu_custom_call.1} parent=0 // pred_fallthru
    _
  // Predicated region
  $region18: #{tpu_custom_call.1} parent=0 // pred_check
    _
  $region19: #{tpu_custom_call.1} parent=0 // pred_check_branch
    %29 = sbr.rel (0) target = $region21
  $region20: #{tpu_custom_call.1} parent=0 // pred_region
    _
  $region21: #{tpu_custom_call.1} parent=0 // pred_fallthru
    _
  // Predicated region
  $region22: #{tpu_custom_call.1} parent=0 // pred_check
    _
  $region23: #{tpu_custom_call.1} parent=0 // pred_check_branch
    %31 = sbr.rel (0) target = $region25
  $region24: #{tpu_custom_call.1} parent=0 // pred_region
    _
  $region25: #{tpu_custom_call.1} parent=0 // pred_fallthru
    _
  // Predicated region
  $region26: #{tpu_custom_call.1} parent=0 // pred_check
    _
  $region27: #{tpu_custom_call.1} parent=0 // pred_check_branch
    %33 = sbr.rel (0) target = $region29
  $region28: #{tpu_custom_call.1} parent=0 // pred_region
    _
  $region29: #{tpu_custom_call.1} parent=0 // pred_fallthru
    _
  // Predicated region
  $region30: #{tpu_custom_call.1} parent=0 // pred_check
    _
  $region31: #{tpu_custom_call.1} parent=0 // pred_check_branch
    %35 = sbr.rel (0) target = $region33
  $region32: #{tpu_custom_call.1} parent=0 // pred_region
    _
  $region33: #{tpu_custom_call.1} parent=0 // pred_fallthru
    _
  // Predicated region
  $region34: #{tpu_custom_call.1} parent=0 // pred_check
    _
  $region35: #{tpu_custom_call.1} parent=0 // pred_check_branch
    %37 = sbr.rel (0) target = $region37
  $region36: #{tpu_custom_call.1} parent=0 // pred_region
    _
  $region37: #{tpu_custom_call.1} parent=0 // pred_fallthru
    _
  // Predicated region
  $region38: #{tpu_custom_call.1} parent=0 // pred_check
    _
  $region39: #{tpu_custom_call.1} parent=0 // pred_check_branch
    %39 = sbr.rel (0) target = $region41
  $region40: #{tpu_custom_call.1} parent=0 // pred_region
    _
  $region41: #{tpu_custom_call.1} parent=0 // pred_fallthru
    _
  // Predicated region
  $region42: #{tpu_custom_call.1} parent=0 // pred_check
    _
  $region43: #{tpu_custom_call.1} parent=0 // pred_check_branch
    %41 = sbr.rel (0) target = $region45
  $region44: #{tpu_custom_call.1} parent=0 // pred_region
    _
  $region45: #{tpu_custom_call.1} parent=0 // pred_fallthru
    _
  // Predicated region
  $region46: #{tpu_custom_call.1} parent=0 // pred_check
    _
  $region47: #{tpu_custom_call.1} parent=0 // pred_check_branch
    %43 = sbr.rel (0) target = $region49
  $region48: #{tpu_custom_call.1} parent=0 // pred_region
    _
  $region49: #{tpu_custom_call.1} parent=0 // pred_fallthru
    _
  // Predicated region
  $region50: #{tpu_custom_call.1} parent=0 // pred_check
    _
  $region51: #{tpu_custom_call.1} parent=0 // pred_check_branch
    %45 = sbr.rel (0) target = $region53
  $region52: #{tpu_custom_call.1} parent=0 // pred_region
    _
  $region53: #{tpu_custom_call.1} parent=0 // pred_fallthru
    _
  %v46 = vld [vmem:[%s0] sm:$0xff]
  %v47 = vld [vmem:[%s1] sm:$0xff]
  %v48 = vld [vmem:[%s1 + $0x8] sm:$0xff]
  %v49 = vld [vmem:[%s1 + $0x10] sm:$0xff]
  %v50 = vld [vmem:[%s1 + $0x18] sm:$0xff]
  %v51 = vld [vmem:[%s2] sm:$0x1]
  %v53 = vlaneseq
  %v54 = vshrl.u32 %v53, 7
  %v55 = vsub.s32 0, %v54
  %v56 = vrot.slane %v51, %v55
  %vm58 = vcmask 261120
  %v60 = vsel %vm58, %v46, 0
  %62 = vmatprep.subr.mxu0 0.0
  %63 = vmatpush1.msra.mxu0 0.0
  %64 = vmatprep.subr.mxu0 0.0
  %65 = vmatpush1.msra.mxu0 0.0
  %66 = vmatprep.subr.mxu0 0.0
  %67 = vmatpush1.msra.mxu0 0.0
  %68 = vmatprep.subr.mxu0 0.0
  %69 = vmatpush1.msra.mxu0 0.0
  %70 = vmatprep.subr.mxu0 0.0
  %71 = vmatpush1.msra.mxu0 0.0
  %72 = vmatprep.subr.mxu0 0.0
  %73 = vmatpush1.msra.mxu0 0.0
  %74 = vmatprep.subr.mxu0 0.0
  %75 = vmatpush1.msra.mxu0 0.0
  %76 = vmatprep.subr.mxu0 0.0
  %77 = vmatpush1.msra.mxu0 0.0
  %78 = vmatprep.subr.mxu0 0.0
  %79 = vmatpush1.msra.mxu0 0.0
  %80 = vmatprep.subr.mxu0 0.0
  %81 = vmatpush1.msra.mxu0 0.0
  %82 = vmatprep.subr.mxu0 0.0
  %83 = vmatpush1.msra.mxu0 0.0
  %84 = vmatprep.subr.mxu0 0.0
  %85 = vmatpush1.msra.mxu0 0.0
  %86 = vmatprep.subr.mxu0 0.0
  %87 = vmatpush1.msra.mxu0 %v50
  %88 = vmatprep.subr.mxu0 0.0
  %89 = vmatpush1.msra.mxu0 %v49
  %90 = vmatprep.subr.mxu0 0.0
  %91 = vmatpush1.msra.mxu0 %v48
  %92 = vmatprep.subr.mxu0 0.0
  %93 = vmatpush1.msra.mxu0 %v47
  %94 = vmatprep.subr.mxu0 0.0
  %95 = vmatpush2.msra.mxu0 0.0
  %96 = vmatprep.subr.mxu0 0.0
  %97 = vmatpush2.msra.mxu0 0.0
  %98 = vmatprep.subr.mxu0 0.0
  %99 = vmatpush2.msra.mxu0 0.0
  %100 = vmatprep.subr.mxu0 0.0
  %101 = vmatpush2.msra.mxu0 0.0
  %102 = vmatprep.subr.mxu0 0.0
  %103 = vmatpush2.msra.mxu0 0.0
  %104 = vmatprep.subr.mxu0 0.0
  %105 = vmatpush2.msra.mxu0 0.0
  %106 = vmatprep.subr.mxu0 0.0
  %107 = vmatpush2.msra.mxu0 0.0
  %108 = vmatprep.subr.mxu0 0.0
  %109 = vmatpush2.msra.mxu0 0.0
  %110 = vmatprep.subr.mxu0 0.0
  %111 = vmatpush2.msra.mxu0 0.0
  %112 = vmatprep.subr.mxu0 0.0
  %113 = vmatpush2.msra.mxu0 0.0
  %114 = vmatprep.subr.mxu0 0.0
  %115 = vmatpush2.msra.mxu0 0.0
  %116 = vmatprep.subr.mxu0 0.0
  %117 = vmatpush2.msra.mxu0 0.0
  %118 = vmatprep.subr.mxu0 0.0
  %119 = vmatpush2.msra.mxu0 0.0
  %120 = vmatprep.subr.mxu0 0.0
  %121 = vmatpush2.msra.mxu0 0.0
  %122 = vmatprep.subr.mxu0 0.0
  %123 = vmatpush2.msra.mxu0 0.0
  %124 = vmatprep.subr.mxu0 0.0
  %125 = vmatpush2.msra.mxu0 0.0
  %126 = vmatprep.mubr.f32.mxu0 0.0
  %127 = vmatmul.mubr.f32.gmra.mxu0 %v60
  %v128 = vpop.f32.mrf.mxu0
  %v129 = vadd.f32 %v56, %v128
  %v130 = vpop.f32.mrf.mxu0
  %131 = vdwg.mxu0
  %v132 = vmax.f32 %v129, 0.0
  %v133 = vld [vmem:[%s3] sm:$0xff]
  %v134 = vld [vmem:[%s3 + $0x8] sm:$0xff]
  %v135 = vld [vmem:[%s3 + $0x10] sm:$0xff]
  %v136 = vld [vmem:[%s3 + $0x18] sm:$0xff]
  %v137 = vld [vmem:[%s3 + $0x20] sm:$0xff]
  %v138 = vld [vmem:[%s3 + $0x28] sm:$0xff]
  %v139 = vld [vmem:[%s3 + $0x30] sm:$0xff]
  %v140 = vld [vmem:[%s3 + $0x38] sm:$0xff]
  %v141 = vld [vmem:[%s4] sm:$0x1]
  %v143 = vlaneseq
  %v144 = vshrl.u32 %v143, 7
  %v145 = vsub.s32 0, %v144
  %v146 = vrot.slane %v141, %v145
  %vm148 = vcmask 523264
  %v150 = vsel %vm148, %v132, 0
  %152 = vmatprep.subr.mxu0 0.0
  %153 = vmatpush1.msra.mxu0 0.0
  %154 = vmatprep.subr.mxu0 0.0
  %155 = vmatpush1.msra.mxu0 0.0
  %156 = vmatprep.subr.mxu0 0.0
  %157 = vmatpush1.msra.mxu0 0.0
  %158 = vmatprep.subr.mxu0 0.0
  %159 = vmatpush1.msra.mxu0 0.0
  %160 = vmatprep.subr.mxu0 0.0
  %161 = vmatpush1.msra.mxu0 0.0
  %162 = vmatprep.subr.mxu0 0.0
  %163 = vmatpush1.msra.mxu0 0.0
  %164 = vmatprep.subr.mxu0 0.0
  %165 = vmatpush1.msra.mxu0 0.0
  %166 = vmatprep.subr.mxu0 0.0
  %167 = vmatpush1.msra.mxu0 0.0
  %168 = vmatprep.subr.mxu0 0.0
  %169 = vmatpush1.msra.mxu0 %v140
  %170 = vmatprep.subr.mxu0 0.0
  %171 = vmatpush1.msra.mxu0 %v139
  %172 = vmatprep.subr.mxu0 0.0
  %173 = vmatpush1.msra.mxu0 %v138
  %174 = vmatprep.subr.mxu0 0.0
  %175 = vmatpush1.msra.mxu0 %v137
  %176 = vmatprep.subr.mxu0 0.0
  %177 = vmatpush1.msra.mxu0 %v136
  %178 = vmatprep.subr.mxu0 0.0
  %179 = vmatpush1.msra.mxu0 %v135
  %180 = vmatprep.subr.mxu0 0.0
  %181 = vmatpush1.msra.mxu0 %v134
  %182 = vmatprep.subr.mxu0 0.0
  %183 = vmatpush1.msra.mxu0 %v133
  %184 = vmatprep.subr.mxu0 0.0
  %185 = vmatpush2.msra.mxu0 0.0
  %186 = vmatprep.subr.mxu0 0.0
  %187 = vmatpush2.msra.mxu0 0.0
  %188 = vmatprep.subr.mxu0 0.0
  %189 = vmatpush2.msra.mxu0 0.0
  %190 = vmatprep.subr.mxu0 0.0
  %191 = vmatpush2.msra.mxu0 0.0
  %192 = vmatprep.subr.mxu0 0.0
  %193 = vmatpush2.msra.mxu0 0.0
  %194 = vmatprep.subr.mxu0 0.0
  %195 = vmatpush2.msra.mxu0 0.0
  %196 = vmatprep.subr.mxu0 0.0
  %197 = vmatpush2.msra.mxu0 0.0
  %198 = vmatprep.subr.mxu0 0.0
  %199 = vmatpush2.msra.mxu0 0.0
  %200 = vmatprep.subr.mxu0 0.0
  %201 = vmatpush2.msra.mxu0 0.0
  %202 = vmatprep.subr.mxu0 0.0
  %203 = vmatpush2.msra.mxu0 0.0
  %204 = vmatprep.subr.mxu0 0.0
  %205 = vmatpush2.msra.mxu0 0.0
  %206 = vmatprep.subr.mxu0 0.0
  %207 = vmatpush2.msra.mxu0 0.0
  %208 = vmatprep.subr.mxu0 0.0
  %209 = vmatpush2.msra.mxu0 0.0
  %210 = vmatprep.subr.mxu0 0.0
  %211 = vmatpush2.msra.mxu0 0.0
  %212 = vmatprep.subr.mxu0 0.0
  %213 = vmatpush2.msra.mxu0 0.0
  %214 = vmatprep.subr.mxu0 0.0
  %215 = vmatpush2.msra.mxu0 0.0
  %216 = vmatprep.mubr.f32.mxu0 0.0
  %217 = vmatmul.mubr.f32.gmra.mxu0 %v150
  %v218 = vpop.f32.mrf.mxu0
  %v219 = vadd.f32 %v146, %v218
  %v220 = vpop.f32.mrf.mxu0
  %221 = vdwg.mxu0
  %v222 = vmax.f32 %v219, 0.0
  %v223 = vld [vmem:[%s5] sm:$0xff]
  %v224 = vld [vmem:[%s5 + $0x8] sm:$0xff]
  %v225 = vld [vmem:[%s5 + $0x10] sm:$0xff]
  %v226 = vld [vmem:[%s5 + $0x18] sm:$0xff]
  %v227 = vld [vmem:[%s6] sm:$0x1]
  %v229 = vlaneseq
  %v230 = vshrl.u32 %v229, 7
  %v231 = vsub.s32 0, %v230
  %v232 = vrot.slane %v227, %v231
  %v235 = vsel %vm58, %v222, 0
  %237 = vmatprep.subr.mxu0 0.0
  %238 = vmatpush1.msra.mxu0 0.0
  %239 = vmatprep.subr.mxu0 0.0
  %240 = vmatpush1.msra.mxu0 0.0
  %241 = vmatprep.subr.mxu0 0.0
  %242 = vmatpush1.msra.mxu0 0.0
  %243 = vmatprep.subr.mxu0 0.0
  %244 = vmatpush1.msra.mxu0 0.0
  %245 = vmatprep.subr.mxu0 0.0
  %246 = vmatpush1.msra.mxu0 0.0
  %247 = vmatprep.subr.mxu0 0.0
  %248 = vmatpush1.msra.mxu0 0.0
  %249 = vmatprep.subr.mxu0 0.0
  %250 = vmatpush1.msra.mxu0 0.0
  %251 = vmatprep.subr.mxu0 0.0
  %252 = vmatpush1.msra.mxu0 0.0
  %253 = vmatprep.subr.mxu0 0.0
  %254 = vmatpush1.msra.mxu0 0.0
  %255 = vmatprep.subr.mxu0 0.0
  %256 = vmatpush1.msra.mxu0 0.0
  %257 = vmatprep.subr.mxu0 0.0
  %258 = vmatpush1.msra.mxu0 0.0
  %259 = vmatprep.subr.mxu0 0.0
  %260 = vmatpush1.msra.mxu0 0.0
  %261 = vmatprep.subr.mxu0 0.0
  %262 = vmatpush1.msra.mxu0 %v226
  %263 = vmatprep.subr.mxu0 0.0
  %264 = vmatpush1.msra.mxu0 %v225
  %265 = vmatprep.subr.mxu0 0.0
  %266 = vmatpush1.msra.mxu0 %v224
  %267 = vmatprep.subr.mxu0 0.0
  %268 = vmatpush1.msra.mxu0 %v223
  %269 = vmatprep.subr.mxu0 0.0
  %270 = vmatpush2.msra.mxu0 0.0
  %271 = vmatprep.subr.mxu0 0.0
  %272 = vmatpush2.msra.mxu0 0.0
  %273 = vmatprep.subr.mxu0 0.0
  %274 = vmatpush2.msra.mxu0 0.0
  %275 = vmatprep.subr.mxu0 0.0
  %276 = vmatpush2.msra.mxu0 0.0
  %277 = vmatprep.subr.mxu0 0.0
  %278 = vmatpush2.msra.mxu0 0.0
  %279 = vmatprep.subr.mxu0 0.0
  %280 = vmatpush2.msra.mxu0 0.0
  %281 = vmatprep.subr.mxu0 0.0
  %282 = vmatpush2.msra.mxu0 0.0
  %283 = vmatprep.subr.mxu0 0.0
  %284 = vmatpush2.msra.mxu0 0.0
  %285 = vmatprep.subr.mxu0 0.0
  %286 = vmatpush2.msra.mxu0 0.0
  %287 = vmatprep.subr.mxu0 0.0
  %288 = vmatpush2.msra.mxu0 0.0
  %289 = vmatprep.subr.mxu0 0.0
  %290 = vmatpush2.msra.mxu0 0.0
  %291 = vmatprep.subr.mxu0 0.0
  %292 = vmatpush2.msra.mxu0 0.0
  %293 = vmatprep.subr.mxu0 0.0
  %294 = vmatpush2.msra.mxu0 0.0
  %295 = vmatprep.subr.mxu0 0.0
  %296 = vmatpush2.msra.mxu0 0.0
  %297 = vmatprep.subr.mxu0 0.0
  %298 = vmatpush2.msra.mxu0 0.0
  %299 = vmatprep.subr.mxu0 0.0
  %300 = vmatpush2.msra.mxu0 0.0
  %301 = vmatprep.mubr.f32.mxu0 0.0
  %302 = vmatmul.mubr.f32.gmra.mxu0 %v235
  %v303 = vpop.f32.mrf.mxu0
  %v304 = vadd.f32 %v232, %v303
  %v305 = vpop.f32.mrf.mxu0
  %306 = vdwg.mxu0
  %v307 = vmax.f32 %v304, 0.0
  %v308 = vld [vmem:[%s7] sm:$0xff]
  %v309 = vld [vmem:[%s7 + $0x8] sm:$0xff]
  %v310 = vld [vmem:[%s7 + $0x10] sm:$0xff]
  %v311 = vld [vmem:[%s7 + $0x18] sm:$0xff]
  %v312 = vld [vmem:[%s8] sm:$0x1]
  %v314 = vlaneseq
  %v315 = vshrl.u32 %v314, 7
  %v316 = vsub.s32 0, %v315
  %v317 = vrot.slane %v312, %v316
  %v320 = vsel %vm58, %v307, 0
  %322 = vmatprep.subr.mxu0 0.0
  %323 = vmatpush1.msra.mxu0 0.0
  %324 = vmatprep.subr.mxu0 0.0
  %325 = vmatpush1.msra.mxu0 0.0
  %326 = vmatprep.subr.mxu0 0.0
  %327 = vmatpush1.msra.mxu0 0.0
  %328 = vmatprep.subr.mxu0 0.0
  %329 = vmatpush1.msra.mxu0 0.0
  %330 = vmatprep.subr.mxu0 0.0
  %331 = vmatpush1.msra.mxu0 0.0
  %332 = vmatprep.subr.mxu0 0.0
  %333 = vmatpush1.msra.mxu0 0.0
  %334 = vmatprep.subr.mxu0 0.0
  %335 = vmatpush1.msra.mxu0 0.0
  %336 = vmatprep.subr.mxu0 0.0
  %337 = vmatpush1.msra.mxu0 0.0
  %338 = vmatprep.subr.mxu0 0.0
  %339 = vmatpush1.msra.mxu0 0.0
  %340 = vmatprep.subr.mxu0 0.0
  %341 = vmatpush1.msra.mxu0 0.0
  %342 = vmatprep.subr.mxu0 0.0
  %343 = vmatpush1.msra.mxu0 0.0
  %344 = vmatprep.subr.mxu0 0.0
  %345 = vmatpush1.msra.mxu0 0.0
  %346 = vmatprep.subr.mxu0 0.0
  %347 = vmatpush1.msra.mxu0 %v311
  %348 = vmatprep.subr.mxu0 0.0
  %349 = vmatpush1.msra.mxu0 %v310
  %350 = vmatprep.subr.mxu0 0.0
  %351 = vmatpush1.msra.mxu0 %v309
  %352 = vmatprep.subr.mxu0 0.0
  %353 = vmatpush1.msra.mxu0 %v308
  %354 = vmatprep.subr.mxu0 0.0
  %355 = vmatpush2.msra.mxu0 0.0
  %356 = vmatprep.subr.mxu0 0.0
  %357 = vmatpush2.msra.mxu0 0.0
  %358 = vmatprep.subr.mxu0 0.0
  %359 = vmatpush2.msra.mxu0 0.0
  %360 = vmatprep.subr.mxu0 0.0
  %361 = vmatpush2.msra.mxu0 0.0
  %362 = vmatprep.subr.mxu0 0.0
  %363 = vmatpush2.msra.mxu0 0.0
  %364 = vmatprep.subr.mxu0 0.0
  %365 = vmatpush2.msra.mxu0 0.0
  %366 = vmatprep.subr.mxu0 0.0
  %367 = vmatpush2.msra.mxu0 0.0
  %368 = vmatprep.subr.mxu0 0.0
  %369 = vmatpush2.msra.mxu0 0.0
  %370 = vmatprep.subr.mxu0 0.0
  %371 = vmatpush2.msra.mxu0 0.0
  %372 = vmatprep.subr.mxu0 0.0
  %373 = vmatpush2.msra.mxu0 0.0
  %374 = vmatprep.subr.mxu0 0.0
  %375 = vmatpush2.msra.mxu0 0.0
  %376 = vmatprep.subr.mxu0 0.0
  %377 = vmatpush2.msra.mxu0 0.0
  %378 = vmatprep.subr.mxu0 0.0
  %379 = vmatpush2.msra.mxu0 0.0
  %380 = vmatprep.subr.mxu0 0.0
  %381 = vmatpush2.msra.mxu0 0.0
  %382 = vmatprep.subr.mxu0 0.0
  %383 = vmatpush2.msra.mxu0 0.0
  %384 = vmatprep.subr.mxu0 0.0
  %385 = vmatpush2.msra.mxu0 0.0
  %386 = vmatprep.mubr.f32.mxu0 0.0
  %387 = vmatmul.mubr.f32.gmra.mxu0 %v320
  %v388 = vpop.f32.mrf.mxu0
  %v389 = vadd.f32 %v317, %v388
  %v390 = vpop.f32.mrf.mxu0
  %391 = vdwg.mxu0
  %v392 = vmax.f32 %v389, 0.0
  %v393 = vld [vmem:[%s9] sm:$0xff]
  %v394 = vld [vmem:[%s9 + $0x8] sm:$0xff]
  %v395 = vld [vmem:[%s10] sm:$0x1]
  %v397 = vlaneseq
  %v398 = vshrl.u32 %v397, 7
  %v399 = vsub.s32 0, %v398
  %v400 = vrot.slane %v395, %v399
  %vm402 = vcmask 130048
  %v404 = vsel %vm402, %v392, 0
  %406 = vmatprep.subr.mxu0 0.0
  %407 = vmatpush1.msra.mxu0 0.0
  %408 = vmatprep.subr.mxu0 0.0
  %409 = vmatpush1.msra.mxu0 0.0
  %410 = vmatprep.subr.mxu0 0.0
  %411 = vmatpush1.msra.mxu0 0.0
  %412 = vmatprep.subr.mxu0 0.0
  %413 = vmatpush1.msra.mxu0 0.0
  %414 = vmatprep.subr.mxu0 0.0
  %415 = vmatpush1.msra.mxu0 0.0
  %416 = vmatprep.subr.mxu0 0.0
  %417 = vmatpush1.msra.mxu0 0.0
  %418 = vmatprep.subr.mxu0 0.0
  %419 = vmatpush1.msra.mxu0 0.0
  %420 = vmatprep.subr.mxu0 0.0
  %421 = vmatpush1.msra.mxu0 0.0
  %422 = vmatprep.subr.mxu0 0.0
  %423 = vmatpush1.msra.mxu0 0.0
  %424 = vmatprep.subr.mxu0 0.0
  %425 = vmatpush1.msra.mxu0 0.0
  %426 = vmatprep.subr.mxu0 0.0
  %427 = vmatpush1.msra.mxu0 0.0
  %428 = vmatprep.subr.mxu0 0.0
  %429 = vmatpush1.msra.mxu0 0.0
  %430 = vmatprep.subr.mxu0 0.0
  %431 = vmatpush1.msra.mxu0 0.0
  %432 = vmatprep.subr.mxu0 0.0
  %433 = vmatpush1.msra.mxu0 0.0
  %434 = vmatprep.subr.mxu0 0.0
  %435 = vmatpush1.msra.mxu0 %v394
  %436 = vmatprep.subr.mxu0 0.0
  %437 = vmatpush1.msra.mxu0 %v393
  %438 = vmatprep.subr.mxu0 0.0
  %439 = vmatpush2.msra.mxu0 0.0
  %440 = vmatprep.subr.mxu0 0.0
  %441 = vmatpush2.msra.mxu0 0.0
  %442 = vmatprep.subr.mxu0 0.0
  %443 = vmatpush2.msra.mxu0 0.0
  %444 = vmatprep.subr.mxu0 0.0
  %445 = vmatpush2.msra.mxu0 0.0
  %446 = vmatprep.subr.mxu0 0.0
  %447 = vmatpush2.msra.mxu0 0.0
  %448 = vmatprep.subr.mxu0 0.0
  %449 = vmatpush2.msra.mxu0 0.0
  %450 = vmatprep.subr.mxu0 0.0
  %451 = vmatpush2.msra.mxu0 0.0
  %452 = vmatprep.subr.mxu0 0.0
  %453 = vmatpush2.msra.mxu0 0.0
  %454 = vmatprep.subr.mxu0 0.0
  %455 = vmatpush2.msra.mxu0 0.0
  %456 = vmatprep.subr.mxu0 0.0
  %457 = vmatpush2.msra.mxu0 0.0
  %458 = vmatprep.subr.mxu0 0.0
  %459 = vmatpush2.msra.mxu0 0.0
  %460 = vmatprep.subr.mxu0 0.0
  %461 = vmatpush2.msra.mxu0 0.0
  %462 = vmatprep.subr.mxu0 0.0
  %463 = vmatpush2.msra.mxu0 0.0
  %464 = vmatprep.subr.mxu0 0.0
  %465 = vmatpush2.msra.mxu0 0.0
  %466 = vmatprep.subr.mxu0 0.0
  %467 = vmatpush2.msra.mxu0 0.0
  %468 = vmatprep.subr.mxu0 0.0
  %469 = vmatpush2.msra.mxu0 0.0
  %470 = vmatprep.mubr.f32.mxu0 0.0
  %471 = vmatmul.mubr.f32.gmra.mxu0 %v404
  %v472 = vpop.f32.mrf.mxu0
  %v473 = vadd.f32 %v400, %v472
  %v474 = vpop.f32.mrf.mxu0
  %475 = vdwg.mxu0
  %v476 = vmax.f32 %v473, 0.0
  %v477 = vld [vmem:[%s11] sm:$0x1]
  %v479 = vlaneseq
  %v480 = vshrl.u32 %v479, 7
  %v481 = vsub.s32 0, %v480
  %v482 = vrot.slane %v477, %v481
  %v484 = vmul.f32 %v476, %v482
  %v485 = vsel %vm402, %v484, 0.0
  %486 = vadd.xlane.f32.xlu0 %v485
  %v487 = vpop.xlane.xlu0 %486
  %v488 = vld [vmem:[#allocation2] sm:$0x1]
  %v490 = vlaneseq
  %v491 = vshrl.u32 %v490, 7
  %v492 = vsub.s32 0, %v491
  %v493 = vrot.slane %v488, %v492
  %v495 = vadd.f32 %v487, %v493
  %vm496 = vcmask 7168
  %497 = vst.msk [vmem:[%s13] sm:$0xff] %vm496, %v495
  // Predicated region
  $region54: #{tpu_custom_call.1} parent=0 // pred_check
    _
  $region55: #{tpu_custom_call.1} parent=0 // pred_check_branch
    %499 = sbr.rel (0) target = $region57
  $region56: #{tpu_custom_call.1} parent=0 // pred_region
    _
  $region57: #{tpu_custom_call.1} parent=0 // pred_fallthru
    _
  // Predicated region
  $region58: #{tpu_custom_call.1} parent=0 // pred_check
    _
  $region59: #{tpu_custom_call.1} parent=0 // pred_check_branch
    %501 = sbr.rel (0) target = $region61
  $region60: #{tpu_custom_call.1} parent=0 // pred_region
    _
  $region61: #{tpu_custom_call.1} parent=0 // pred_fallthru
    _

</llo_original>
